<compile_context>
chip_gen: v5e
topology: v5e:2x2
jax: 0.10.0
libtpu: 0.0.40
codegen_flags: <defaults>
</compile_context>

<pallas_src>
import jax
import jax.numpy as jnp
from jax.experimental import pallas as pl
from jax.experimental.pallas import tpu as pltpu

_LANE = 128
_MAX_COLS = 4096  # lane-dense slab width cap


def _h_swish_kernel(x_ref, o_ref):
    # h_sigmoid(x) = relu6(x + 3) / 6 ; h_swish(x) = x * h_sigmoid(x)
    # Compute in f32 (free: kernel is HBM-bound), store in the input dtype.
    x = x_ref[...].astype(jnp.float32)
    hs = jnp.clip(x + 3.0, 0.0, 6.0) * (1.0 / 6.0)
    o_ref[...] = (x * hs).astype(o_ref.dtype)


def _h_swish_jnp(x):
    # Tiny-tail / fallback path (identical math, f32 internal).
    xf = x.astype(jnp.float32)
    return (xf * (jnp.clip(xf + 3.0, 0.0, 6.0) * (1.0 / 6.0))).astype(x.dtype)


def _sublane_min(dtype):
    # minimum sublane tile: 8 for 4-byte, 16 for 2-byte, 32 for 1-byte dtypes
    itemsize = jnp.dtype(dtype).itemsize
    return max(8, 32 // itemsize)


def _pick_cols(n):
    """Largest multiple of 128 that divides n exactly, capped at _MAX_COLS.
    Returns None if no such divisor exists (ragged fallback)."""
    max_k = min(_MAX_COLS, n) // _LANE
    for k in range(max_k, 0, -1):
        c = k * _LANE
        if n % c == 0:
            return c
    return None


def _chip_params():
    """(target block bytes per buffer, vmem_limit_bytes), tuned per chip."""
    try:
        vmem = pltpu.get_tpu_info().vmem_capacity_bytes
    except Exception:
        vmem = 64 * 1024 * 1024  # conservative: assume v7x-class
    if vmem <= 64 * 1024 * 1024:
        # v7x-class (64 MiB VMEM/TC, ~3.2 TB/s HBM): bigger blocks so the
        # ~0.35 us per-step overhead stays <5% of the per-block DMA time.
        # Working set: 2 arrays x 2 buffers x 8 MiB = 32 MiB < 44 MiB limit.
        return 8 * 1024 * 1024, 44 * 1024 * 1024
    # v5e/v6e (128 MiB physical VMEM): 4 MiB blocks; raise the scoped limit
    # explicitly so the 16 MiB working set never collides with the 16 MiB
    # default scoped-VMEM limit on v5e.
    return 4 * 1024 * 1024, 64 * 1024 * 1024


def _h_swish_2d(x2d):
    rows, cols = x2d.shape
    dtype = x2d.dtype
    itemsize = jnp.dtype(dtype).itemsize
    sub = _sublane_min(dtype)
    block_bytes, vmem_limit = _chip_params()

    # Row tile sized for ~block_bytes per buffer, rounded to the dtype's
    # sublane minimum; a full-extent block is always legal.
    row_bytes = cols * itemsize
    tr = max(sub, (block_bytes // row_bytes) // sub * sub)
    if rows > sub:
        # Guarantee a multi-step grid (>= ~4 steps when possible: 2 per v7x
        # TensorCore) so the "parallel" axis can shard across both cores and
        # keeps the pipeline's prefetch/writeback overlapped.
        tr_cap = max(sub, (rows // 4) // sub * sub)
        tr = min(tr, tr_cap)
    if tr >= rows:
        tr = rows
    grid = (pl.cdiv(rows, tr),)

    return pl.pallas_call(
        _h_swish_kernel,
        out_shape=jax.ShapeDtypeStruct((rows, cols), dtype),
        grid=grid,
        in_specs=[pl.BlockSpec((tr, cols), lambda i: (i, 0))],
        out_specs=pl.BlockSpec((tr, cols), lambda i: (i, 0)),
        compiler_params=pltpu.CompilerParams(
            dimension_semantics=("parallel",),
            vmem_limit_bytes=vmem_limit,
        ),
        cost_estimate=pl.CostEstimate(
            flops=4 * rows * cols,
            transcendentals=0,
            bytes_accessed=2 * rows * cols * itemsize,
        ),
    )(x2d)


def h_swish(x):
    """Elementwise hard-swish, shape/dtype preserving (NCHW or anything)."""
    orig_shape = x.shape
    n = x.size
    if n == 0:
        return x
    x_flat = x.reshape(-1)

    cols = _pick_cols(n)
    if cols is not None:
        # Aligned path (common case): no pad, no slice, unmasked wide stores.
        out2d = _h_swish_2d(x_flat.reshape(n // cols, cols))
        return out2d.reshape(orig_shape)

    # Ragged path: Pallas on the aligned head, tiny (<cols) tail via jnp,
    # stitched back together — no full-tensor pad / final slice copies.
    cols = min(_MAX_COLS, (n // _LANE) * _LANE)
    if cols == 0:
        # Fewer than 128 elements total: negligible, plain jnp.
        return _h_swish_jnp(x)
    main = (n // cols) * cols
    head = _h_swish_2d(x_flat[:main].reshape(main // cols, cols)).reshape(-1)
    tail = _h_swish_jnp(x_flat[main:])
    return jnp.concatenate([head, tail]).reshape(orig_shape)


if __name__ == "__main__":
    key = jax.random.PRNGKey(0)
    k0, k1, k2, k3, k4 = jax.random.split(key, 5)

    def ref(x):
        xf = x.astype(jnp.float32)
        return (xf * (jnp.clip(xf + 3.0, 0.0, 6.0) * (1.0 / 6.0))).astype(x.dtype)

    # 1) Main NCHW f32 case (size divisible by 128 -> aligned lane-dense path).
    x = jax.random.normal(k0, (2, 4, 16, 16), dtype=jnp.float32) * 3.0
    out = jax.block_until_ready(h_swish(x))
    assert out.shape == x.shape and out.dtype == x.dtype
    assert jnp.allclose(out, ref(x), atol=1e-5, rtol=1e-5)

    # 2) Larger f32 case -> exercises the multi-step "parallel" grid.
    xl = jax.random.normal(k1, (4, 32, 32, 32), dtype=jnp.float32) * 3.0
    outl = jax.block_until_ready(h_swish(xl))
    assert outl.shape == xl.shape and outl.dtype == xl.dtype
    assert jnp.allclose(outl, ref(xl), atol=1e-5, rtol=1e-5)

    # 3) bf16 kept end-to-end in HBM (f32 compute inside the kernel).
    xb = (jax.random.normal(k2, (2, 8, 20, 20), dtype=jnp.float32) * 3.0
          ).astype(jnp.bfloat16)
    outb = jax.block_until_ready(h_swish(xb))
    assert outb.shape == xb.shape and outb.dtype == xb.dtype
    assert jnp.allclose(outb.astype(jnp.float32),
                        ref(xb).astype(jnp.float32), atol=2e-2, rtol=2e-2)

    # 4) Ragged size >= 128 -> Pallas head + tiny jnp tail (no pad/slice).
    xr = jax.random.normal(k3, (3, 5, 9), dtype=jnp.float32) * 3.0
    outr = jax.block_until_ready(h_swish(xr))
    assert outr.shape == xr.shape and outr.dtype == xr.dtype
    assert jnp.allclose(outr, ref(xr), atol=1e-5, rtol=1e-5)

    # 5) Tiny ragged size < 128 -> jnp fallback.
    xt = jax.random.normal(k4, (3, 5, 7), dtype=jnp.float32) * 3.0
    outt = jax.block_until_ready(h_swish(xt))
    assert outt.shape == xt.shape and outt.dtype == xt.dtype
    assert jnp.allclose(outt, ref(xt), atol=1e-5, rtol=1e-5)

    print("KERNEL_OK")
</pallas_src>

<mosaic_0001>
module attributes {stable_mosaic.version = 11 : i64} {
  func.func @_h_swish_kernel(%arg0: i32, %arg1: memref<1x2048xf32, #tpu.memory_space<vmem>>, %arg2: memref<1x2048xf32, #tpu.memory_space<vmem>>) attributes {dimension_semantics = [#tpu.dimension_semantics<parallel>], iteration_bounds = array<i64: 1>, scalar_prefetch = 0 : i64, scratch_operands = 0 : i64, tpu.core_type = #tpu.core_type<tc>, window_params = [{transform_indices = @transform_0, window_bounds = array<i64: 1, 2048>}, {transform_indices = @transform_1, window_bounds = array<i64: 1, 2048>}]} {
    %c0 = arith.constant 0 : index
    %c0_0 = arith.constant 0 : index
    %0 = vector.load %arg1[%c0, %c0_0] : memref<1x2048xf32, #tpu.memory_space<vmem>>, vector<1x2048xf32>
    %cst = arith.constant 3.000000e+00 : f32
    %1 = vector.broadcast %cst : f32 to vector<1x2048xf32>
    %2 = arith.addf %0, %1 : vector<1x2048xf32>
    %cst_1 = arith.constant 0.000000e+00 : f32
    %cst_2 = arith.constant 6.000000e+00 : f32
    %3 = vector.broadcast %cst_1 : f32 to vector<1x2048xf32>
    %4 = arith.maximumf %3, %2 : vector<1x2048xf32>
    %5 = vector.broadcast %cst_2 : f32 to vector<1x2048xf32>
    %6 = arith.minimumf %5, %4 : vector<1x2048xf32>
    %cst_3 = arith.constant 0.166666672 : f32
    %7 = vector.broadcast %cst_3 : f32 to vector<1x2048xf32>
    %8 = arith.mulf %6, %7 : vector<1x2048xf32>
    %9 = arith.mulf %0, %8 : vector<1x2048xf32>
    %c0_4 = arith.constant 0 : index
    %c0_5 = arith.constant 0 : index
    %10 = vector.load %arg2[%c0_4, %c0_5] : memref<1x2048xf32, #tpu.memory_space<vmem>>, vector<1x2048xf32>
    tpu.vector_store %arg2[%c0_4, %c0_5], %9 {strides = array<i32>} : memref<1x2048xf32, #tpu.memory_space<vmem>>, vector<1x2048xf32>,
    return
  }
  func.func @transform_0(%arg0: i32) -> (i32, i32) {
    %c0_i32 = arith.constant 0 : i32
    %c0_i32_0 = arith.constant 0 : i32
    return %arg0, %c0_i32 : i32, i32
  }
  func.func @transform_1(%arg0: i32) -> (i32, i32) {
    %c0_i32 = arith.constant 0 : i32
    %c0_i32_0 = arith.constant 0 : i32
    return %arg0, %c0_i32 : i32, i32
  }
}

</mosaic_0001>

<llo_original>
// kernel: tpu_custom_call.1
$region0: #{tpu_custom_call.1}
  #allocation0 [shape = 'u32[]', space=smem, size = 0x4, offset = 0x4, fixed_abs, tag = 'smem constant byte address 0x4 - core index']
  #allocation1 [shape = 'u32[72,128]{1,0:T(1,128)}', space=vmem, size = 0x9000, scoped, tag = 'internal scratch']
  %s0 = inlined_call_operand.hbm [shape: f32[1,2048], index: 0, kind: input, shape index: {}]
  %s1 = inlined_call_operand.hbm [shape: f32[1,2048], index: 1, kind: output, shape index: {}]
  %s2 = sld [smem:[#allocation0]]
  $region18: #{tpu_custom_call.1} parent=0
    _
  %s4 = ssub.s32 1, %s2
  %s5 = scalar_select 0, %s4, %s2
  $region1: #{tpu_custom_call.1} parent=0
    #allocation2 [shape = 'u8[8192]{0}', space=vmem, size = 0x2000, scoped, tag = 'input window, operand 0, single buffered']
    #allocation3 [shape = 's32[1]{0}', space=sflag, size = 0x4, scoped, tag = 'scoped memory for tpu_custom_call.1']
    #allocation4 [shape = 's32[1]{0}', space=sflag, size = 0x4, scoped, tag = 'scoped memory for tpu_custom_call.1']
    #allocation5 [shape = 'u8[8192]{0}', space=vmem, size = 0x2000, scoped, tag = 'output window, operand 0, single buffered']
    %6 = vsyncpa [#allocation3], 0
    %7 = vsyncpa [#allocation4], 0
    // Predicated region
    $region2: #{tpu_custom_call.1} parent=1 // pred_check
      _
    $region3: #{tpu_custom_call.1} parent=1 // pred_check_branch
      %9 = sbr.rel (0) target = $region5
    $region4: #{tpu_custom_call.1} parent=1 // pred_region
      %11 = vsyncadd [#allocation3], 0
      %s13 = sshll.u32 %s0, 4
      %s14 = int_to_ptr.hbm [resolvable:$true] %s13
      %s15 = sshll.u32 [#allocation2], 4
      %s16 = int_to_ptr.vmem [resolvable:$true] %s15
      %18 = dma.hbm_to_vmem [thread:$0]  %s14, 256, %s16, [#allocation3]
    $region5: #{tpu_custom_call.1} parent=1 // pred_fallthru
      _
    // Predicated region
    $region6: #{tpu_custom_call.1} parent=1 // pred_check
      _
    $region7: #{tpu_custom_call.1} parent=1 // pred_check_branch
      %20 = sbr.rel (0) target = $region9
    $region8: #{tpu_custom_call.1} parent=1 // pred_region
      %22 = dma.done [#allocation3], 256
    $region9: #{tpu_custom_call.1} parent=1 // pred_fallthru
      _
    %v23 = vld [vmem:[#allocation2] sm:$0xff]
    %v24 = vld [vmem:[#allocation2 + $0x8] sm:$0xff]
    %v25 = vadd.f32 %v23, 3.0
    %v26 = vadd.f32 %v24, 3.0
    %v27 = vmax.f32 %v25, 0.0
    %v28 = vmax.f32 %v26, 0.0
    %v29 = vmin.f32 %v27, 6.0
    %v30 = vmin.f32 %v28, 6.0
    %v31 = vmul.f32 %v29, 0.16666667
    %v32 = vmul.f32 %v30, 0.16666667
    %v33 = vmul.f32 %v23, %v31
    %v34 = vmul.f32 %v24, %v32
    %35 = vst [vmem:[#allocation5] sm:$0xff] %v33
    %36 = vst [vmem:[#allocation5 + $0x8] sm:$0xff] %v34
    // Predicated region
    $region10: #{tpu_custom_call.1} parent=1 // pred_check
      _
    $region11: #{tpu_custom_call.1} parent=1 // pred_check_branch
      %38 = sbr.rel (0) target = $region13
    $region12: #{tpu_custom_call.1} parent=1 // pred_region
      %40 = vsyncadd [#allocation4], 0
      %s42 = sshll.u32 [#allocation5], 4
      %s43 = int_to_ptr.vmem [resolvable:$true] %s42
      %s44 = sshll.u32 %s1, 4
      %s45 = int_to_ptr.hbm [resolvable:$true] %s44
      %47 = dma.vmem_to_hbm [thread:$0]  %s43, 256, %s45, [#allocation4]
    $region13: #{tpu_custom_call.1} parent=1 // pred_fallthru
      _
    // Predicated region
    $region14: #{tpu_custom_call.1} parent=1 // pred_check
      _
    $region15: #{tpu_custom_call.1} parent=1 // pred_check_branch
      %49 = sbr.rel (0) target = $region17
    $region16: #{tpu_custom_call.1} parent=1 // pred_region
      %51 = dma.done [#allocation4], 256
    $region17: #{tpu_custom_call.1} parent=1 // pred_fallthru
      _
    %52 = vsyncpa [#allocation3], 1
    %53 = vsyncpa [#allocation4], 1

</llo_original>
